<compile_context>
chip_gen: v5e
topology: v5e:2x2
jax: 0.10.0
libtpu: 0.0.40
codegen_flags: <defaults>
</compile_context>

<pallas_src>
import functools

import jax
import jax.numpy as jnp
from jax.experimental import pallas as pl
from jax.experimental.pallas import tpu as pltpu


def _vmem_limit_bytes():
    """3/4 of chip VMEM, capped at 96 MiB (v7x -> 48 MiB, v5e/v6e -> 96 MiB)."""
    try:
        cap = int(pltpu.get_tpu_info().vmem_capacity_bytes)
    except Exception:  # query unavailable -> conservative (v7x-safe) default
        cap = 64 * 1024 * 1024
    return max(32 * 1024 * 1024, min(cap * 3 // 4, 96 * 1024 * 1024))


def _dcp_loss_kernel(x_ref, part_ref, *, h, w):
    # x_ref:    (1, C, H*W) block = all channels of one image (input dtype)
    # part_ref: (1, 8, 128) f32 per-image partial-sum block
    hw = h * w
    xb = x_ref[0]                                   # (C, H*W)
    cm = jnp.min(xb, axis=0, keepdims=True)         # (1, H*W) channel-min

    # Flat pixel index p = i*W + j along the lane axis.
    col = jax.lax.broadcasted_iota(jnp.int32, cm.shape, 1)
    j = col % w                                      # column index within a row

    # pltpu.roll follows jnp.roll semantics; shifts normalized to [0, hw).
    sh_right = (hw - 1) % hw   # y[p] = x[p + 1]
    sh_left = 1 % hw           # y[p] = x[p - 1]
    sh_down = (hw - w) % hw    # y[p] = x[p + w]
    sh_up = w % hw             # y[p] = x[p - w]

    # Horizontal 3-min (edge-clamped; wrapped values are masked out).
    right = jnp.where(j == w - 1, cm, pltpu.roll(cm, sh_right, axis=1))
    left = jnp.where(j == 0, cm, pltpu.roll(cm, sh_left, axis=1))
    hmin = jnp.minimum(cm, jnp.minimum(left, right))

    # Vertical 3-min (edge-clamped).
    down = jnp.where(col >= (h - 1) * w, hmin, pltpu.roll(hmin, sh_down, axis=1))
    up = jnp.where(col < w, hmin, pltpu.roll(hmin, sh_up, axis=1))
    vmin = jnp.minimum(hmin, jnp.minimum(up, down))

    # f32 accumulation of the per-image sum (all compares above in x dtype).
    total = jnp.sum(vmin.astype(jnp.float32))
    part_ref[...] = jnp.full(part_ref.shape, total, dtype=part_ref.dtype)


def dcp_loss(x, weighting=1.0):
    """x: (N, C, H, W) array (H, W >= 2). Returns scalar float32 loss."""
    n, c, h, w = x.shape
    dtype = x.dtype
    hw = h * w
    x_flat = x.reshape(n, c, hw)  # free view of contiguous NCHW -> lane-dense

    kernel = functools.partial(_dcp_loss_kernel, h=h, w=w)

    cost = pl.CostEstimate(
        flops=n * (c + 6) * hw,
        transcendentals=0,
        bytes_accessed=n * c * hw * dtype.itemsize + n * 8 * 128 * 4,
    )

    partials = pl.pallas_call(
        kernel,
        out_shape=jax.ShapeDtypeStruct((n, 8, 128), jnp.float32),
        grid_spec=pltpu.PrefetchScalarGridSpec(
            num_scalar_prefetch=0,
            grid=(n,),
            in_specs=[pl.BlockSpec((1, c, hw), lambda i: (i, 0, 0))],
            out_specs=pl.BlockSpec((1, 8, 128), lambda i: (i, 0, 0)),
        ),
        compiler_params=pltpu.CompilerParams(
            dimension_semantics=("parallel",),
            vmem_limit_bytes=_vmem_limit_bytes(),
        ),
        cost_estimate=cost,
    )(x_flat)

    total = jnp.sum(partials[:, 0, 0])
    return (weighting * total) / (n * h * w)


def _dcp_loss_ref(x, weighting=1.0):
    """Pure-JAX reference mirroring the PyTorch forward."""
    n, c, h, w = x.shape
    xp = jnp.pad(
        x.astype(jnp.float32), ((0, 0), (0, 0), (1, 1), (1, 1)), mode="reflect"
    )
    patches = jnp.stack(
        [xp[:, :, dh:dh + h, dw:dw + w] for dh in range(3) for dw in range(3)],
        axis=-1,
    )  # (N, C, H, W, 9)
    dcp = jnp.min(jnp.min(patches, axis=-1), axis=1)  # (N, H, W)
    return weighting * jnp.sum(dcp) / n / h / w


if __name__ == "__main__":
    key = jax.random.PRNGKey(0)
    # batch=2, channels=4, spatial=16 (NCHW, matches the PyTorch module input)
    x = jax.random.uniform(key, (2, 4, 16, 16), dtype=jnp.float32)

    loss = dcp_loss(x, weighting=1.0)
    loss = jax.block_until_ready(loss)

    ref = _dcp_loss_ref(x, weighting=1.0)
    assert jnp.allclose(loss, ref, rtol=1e-5, atol=1e-6), (loss, ref)

    print("KERNEL_OK")
</pallas_src>

<mosaic_0001>
module attributes {stable_mosaic.version = 11 : i64} {
  func.func @_dcp_loss_kernel(%arg0: i32, %arg1: memref<1x4x256xf32, #tpu.memory_space<vmem>>, %arg2: memref<1x8x128xf32, #tpu.memory_space<vmem>>) attributes {dimension_semantics = [#tpu.dimension_semantics<parallel>], iteration_bounds = array<i64: 2>, scalar_prefetch = 0 : i64, scratch_operands = 0 : i64, tpu.core_type = #tpu.core_type<tc>, window_params = [{transform_indices = @transform_0, window_bounds = array<i64: 1, 4, 256>}, {transform_indices = @transform_1, window_bounds = array<i64: 1, 8, 128>}]} {
    %c0 = arith.constant 0 : index
    %c0_0 = arith.constant 0 : index
    %c0_1 = arith.constant 0 : index
    %0 = vector.load %arg1[%c0, %c0_0, %c0_1] : memref<1x4x256xf32, #tpu.memory_space<vmem>>, vector<1x4x256xf32>
    %1 = vector.shape_cast %0 : vector<1x4x256xf32> to vector<4x256xf32>
    %cst = arith.constant dense<0x7F800000> : vector<256xf32>
    %2 = vector.multi_reduction <minimumf>, %1, %cst [0] : vector<4x256xf32> to vector<256xf32>
    %3 = vector.shape_cast %2 : vector<256xf32> to vector<1x256xf32>
    %4 = tpu.iota {dimensions = array<i32: 1>} : vector<1x256xi32>
    %c16_i32 = arith.constant 16 : i32
    %c0_i32 = arith.constant 0 : i32
    %5 = arith.cmpi eq, %c16_i32, %c0_i32 : i32
    %c1_i32 = arith.constant 1 : i32
    %6 = arith.select %5, %c1_i32, %c16_i32 : i32
    %7 = vector.broadcast %6 : i32 to vector<1x256xi32>
    %8 = arith.remsi %4, %7 : vector<1x256xi32>
    %c0_i32_2 = arith.constant 0 : i32
    %9 = vector.broadcast %c0_i32_2 : i32 to vector<1x256xi32>
    %10 = arith.cmpi ne, %8, %9 : vector<1x256xi32>
    %c0_i32_3 = arith.constant 0 : i32
    %11 = vector.broadcast %c0_i32_3 : i32 to vector<1x256xi32>
    %12 = arith.cmpi slt, %8, %11 : vector<1x256xi32>
    %c0_i32_4 = arith.constant 0 : i32
    %13 = arith.cmpi slt, %6, %c0_i32_4 : i32
    %14 = vector.broadcast %13 : i1 to vector<1x256xi1>
    %15 = vector.broadcast %14 : vector<1x256xi1> to vector<1x256xi1>
    %16 = arith.xori %12, %15 : vector<1x256xi1>
    %17 = arith.andi %16, %10 : vector<1x256xi1>
    %18 = vector.broadcast %6 : i32 to vector<1x256xi32>
    %19 = arith.addi %8, %18 : vector<1x256xi32>
    %20 = arith.select %17, %19, %8 : vector<1x256xi1>, vector<1x256xi32>
    %c15_i32 = arith.constant 15 : i32
    %21 = vector.broadcast %c15_i32 : i32 to vector<1x256xi32>
    %22 = arith.cmpi eq, %20, %21 : vector<1x256xi32>
    %c255_i32 = arith.constant 255 : i32
    %23 = tpu.dynamic_rotate %3 by %c255_i32 dim 1 : vector<1x256xf32>, i32 -> vector<1x256xf32>
    %24 = arith.select %22, %3, %23 : vector<1x256xi1>, vector<1x256xf32>
    %c0_i32_5 = arith.constant 0 : i32
    %25 = vector.broadcast %c0_i32_5 : i32 to vector<1x256xi32>
    %26 = arith.cmpi eq, %20, %25 : vector<1x256xi32>
    %c1_i32_6 = arith.constant 1 : i32
    %27 = tpu.dynamic_rotate %3 by %c1_i32_6 dim 1 : vector<1x256xf32>, i32 -> vector<1x256xf32>
    %28 = arith.select %26, %3, %27 : vector<1x256xi1>, vector<1x256xf32>
    %29 = arith.minimumf %28, %24 : vector<1x256xf32>
    %30 = arith.minimumf %3, %29 : vector<1x256xf32>
    %c240_i32 = arith.constant 240 : i32
    %31 = vector.broadcast %c240_i32 : i32 to vector<1x256xi32>
    %32 = arith.cmpi sge, %4, %31 : vector<1x256xi32>
    %c240_i32_7 = arith.constant 240 : i32
    %33 = tpu.dynamic_rotate %30 by %c240_i32_7 dim 1 : vector<1x256xf32>, i32 -> vector<1x256xf32>
    %34 = arith.select %32, %30, %33 : vector<1x256xi1>, vector<1x256xf32>
    %c16_i32_8 = arith.constant 16 : i32
    %35 = vector.broadcast %c16_i32_8 : i32 to vector<1x256xi32>
    %36 = arith.cmpi slt, %4, %35 : vector<1x256xi32>
    %c16_i32_9 = arith.constant 16 : i32
    %37 = tpu.dynamic_rotate %30 by %c16_i32_9 dim 1 : vector<1x256xf32>, i32 -> vector<1x256xf32>
    %38 = arith.select %36, %30, %37 : vector<1x256xi1>, vector<1x256xf32>
    %39 = arith.minimumf %38, %34 : vector<1x256xf32>
    %40 = arith.minimumf %30, %39 : vector<1x256xf32>
    %41 = vector.shape_cast %40 : vector<1x256xf32> to vector<1x1x256xf32>
    %cst_10 = arith.constant dense<0.000000e+00> : vector<1xf32>
    %42 = vector.multi_reduction <add>, %41, %cst_10 [1, 2] : vector<1x1x256xf32> to vector<1xf32>
    %43 = vector.shape_cast %42 : vector<1xf32> to vector<1x1x1xf32>
    %44 = vector.extract %43[0, 0, 0] : f32 from vector<1x1x1xf32>
    %45 = vector.broadcast %44 : f32 to vector<1x8x128xf32>
    %c0_11 = arith.constant 0 : index
    %c0_12 = arith.constant 0 : index
    %c0_13 = arith.constant 0 : index
    %46 = vector.load %arg2[%c0_11, %c0_12, %c0_13] : memref<1x8x128xf32, #tpu.memory_space<vmem>>, vector<1x8x128xf32>
    tpu.vector_store %arg2[%c0_11, %c0_12, %c0_13], %45 {strides = array<i32>} : memref<1x8x128xf32, #tpu.memory_space<vmem>>, vector<1x8x128xf32>,
    return
  }
  func.func @transform_0(%arg0: i32) -> (i32, i32, i32) {
    %c0_i32 = arith.constant 0 : i32
    %c0_i32_0 = arith.constant 0 : i32
    %c0_i32_1 = arith.constant 0 : i32
    return %arg0, %c0_i32, %c0_i32_0 : i32, i32, i32
  }
  func.func @transform_1(%arg0: i32) -> (i32, i32, i32) {
    %c0_i32 = arith.constant 0 : i32
    %c0_i32_0 = arith.constant 0 : i32
    %c0_i32_1 = arith.constant 0 : i32
    return %arg0, %c0_i32, %c0_i32_0 : i32, i32, i32
  }
}

</mosaic_0001>

<llo_original>
// kernel: tpu_custom_call.1
$region0: #{tpu_custom_call.1}
  #allocation0 [shape = 'u32[]', space=smem, size = 0x4, offset = 0x4, fixed_abs, tag = 'smem constant byte address 0x4 - core index']
  #allocation1 [shape = 'u32[72,128]{1,0:T(1,128)}', space=vmem, size = 0x9000, scoped, tag = 'internal scratch']
  %s0 = inlined_call_operand.hbm [shape: f32[2,4,256], index: 0, kind: input, shape index: {}]
  %s1 = inlined_call_operand.hbm [shape: f32[2,8,128], index: 1, kind: output, shape index: {}]
  %s2 = sld [smem:[#allocation0]]
  $region41: #{tpu_custom_call.1} parent=0
    _
  %s4 = ssub.s32 1, %s2
  %s5 = scalar_select 0, %s4, %s2
  $region1: #{tpu_custom_call.1} parent=0
    #allocation2 [shape = 'u8[8192]{0}', space=vmem, size = 0x2000, scoped, tag = 'input window, operand 0']
    #allocation3 [shape = 's32[2]{0}', space=sflag, size = 0x8, scoped, tag = 'scoped memory for tpu_custom_call.1']
    #allocation4 [shape = 's32[2]{0}', space=sflag, size = 0x8, scoped, tag = 'scoped memory for tpu_custom_call.1']
    #allocation5 [shape = 'u8[8192]{0}', space=vmem, size = 0x2000, scoped, tag = 'output window, operand 0']
    %6 = vsyncpa [#allocation3], 0
    %s7 = scalar_lea.sflag [#allocation3], 1
    %8 = vsyncpa %s7, 0
    %9 = vsyncpa [#allocation4], 0
    %s10 = scalar_lea.sflag [#allocation4], 1
    %11 = vsyncpa %s10, 0
    loop: start=0, step=1, limit=4
    $region2: #{tpu_custom_call.1} parent=1 // loop_pre_header
      _
    $region3: #{tpu_custom_call.1} parent=1 // loop_header
      %s13 = sphi 0, %s17
      %p14 = scmp.ge.s32.totalorder %s13, 4
      %s23 = sphi 0, %s25
      %s26 = sphi 0, %s23
      %s27 = sphi 0, %s26
      %s43 = sphi 0, %s27
      %s49 = sphi 0, %s51
      %s52 = sphi 0, %s49
      %s53 = sphi 0, %s52
      %s69 = sphi 0, %s53
    $region4: #{tpu_custom_call.1} parent=1 // loop_header_branch
      %16 = sbr.rel (%p14) target = $region8
    $region5: #{tpu_custom_call.1} parent=1 // loop_body
      %s18 = ssub.s32 %s13, 1
      %s19 = ssub.s32 %s13, 2
      %s20 = sadd.s32 %s13, 1
      %s21 = ssub.s32 %s13, %s20
      %p22 = scmp.eq.s32.totalorder %s21, 0
      %s24 = sadd.s32 %s23, 1
      %s25 = scalar_select %p22, %s23, %s24
      %p28 = pneg %p22
      %p29 = scmp.eq.s32.totalorder %s13, 1
      %p30 = por %p28, %p29
      %p31 = scmp.ne.s32.totalorder %s23, %s26
      %p32 = scmp.eq.s32.totalorder %s13, 0
      %p33 = por %p31, %p32
      %p34 = scmp.ne.s32.totalorder %s23, %s26
      %p35 = scmp.eq.s32.totalorder %s18, 1
      %p36 = por %p34, %p35
      %p37 = scmp.ne.s32.totalorder %s26, %s27
      %p38 = scmp.eq.s32.totalorder %s18, 0
      %p39 = por %p37, %p38
      %p40 = scmp.ne.s32.totalorder %s26, %s27
      %p41 = scmp.eq.s32.totalorder %s19, 1
      %p42 = por %p40, %p41
      %p44 = scmp.ne.s32.totalorder %s27, %s43
      %p45 = scmp.eq.s32.totalorder %s19, 0
      %p46 = por %p44, %p45
      %s47 = ssub.s32 %s13, %s20
      %p48 = scmp.eq.s32.totalorder %s47, 0
      %s50 = sadd.s32 %s49, 1
      %s51 = scalar_select %p48, %s49, %s50
      %p54 = pneg %p48
      %p55 = scmp.eq.s32.totalorder %s13, 1
      %p56 = por %p54, %p55
      %p57 = scmp.ne.s32.totalorder %s49, %s52
      %p58 = scmp.eq.s32.totalorder %s13, 0
      %p59 = por %p57, %p58
      %p60 = scmp.ne.s32.totalorder %s49, %s52
      %p61 = scmp.eq.s32.totalorder %s18, 1
      %p62 = por %p60, %p61
      %p63 = scmp.ne.s32.totalorder %s52, %s53
      %p64 = scmp.eq.s32.totalorder %s18, 0
      %p65 = por %p63, %p64
      %p66 = scmp.ne.s32.totalorder %s52, %s53
      %p67 = scmp.eq.s32.totalorder %s19, 1
      %p68 = por %p66, %p67
      %p70 = scmp.ne.s32.totalorder %s53, %s69
      %p71 = scmp.eq.s32.totalorder %s19, 0
      %p72 = por %p70, %p71
      %p73 = scmp.le.s32.totalorder 1, %s13
      %p74 = scmp.lt.s32.totalorder %s13, 3
      %p75 = pnand %p73, %p74
      %p76 = pneg %p75
      // Predicated region
      $region9: #{tpu_custom_call.1} parent=5 // pred_check
        _
      $region10: #{tpu_custom_call.1} parent=5 // pred_check_branch
        %78 = sbr.rel (%p75) target = $region12
      $region11: #{tpu_custom_call.1} parent=5 // pred_region
        %s79 = ssub.s32 %s13, 1
      $region12: #{tpu_custom_call.1} parent=5 // pred_fallthru
        _
      %p80 = scmp.lt.s32.totalorder %s13, 2
      // Predicated region
      $region13: #{tpu_custom_call.1} parent=5 // pred_check
        %p81 = pneg %p80
      $region14: #{tpu_custom_call.1} parent=5 // pred_check_branch
        %83 = sbr.rel (%p81) target = $region16
      $region15: #{tpu_custom_call.1} parent=5 // pred_region
        // Predicated region
        $region17: #{tpu_custom_call.1} parent=15 // pred_check
          %p84 = pneg %p33
        $region18: #{tpu_custom_call.1} parent=15 // pred_check_branch
          %86 = sbr.rel (%p84) target = $region20
        $region19: #{tpu_custom_call.1} parent=15 // pred_region
          %s87 = sand.u32 %s23, 1
          %s88 = scalar_lea.sflag [#allocation3], %s87
          %s89 = sand.u32 %s23, 1
          %s90 = smul.addr %s89, 8
          %s91 = scalar_lea.vmem [#allocation2], %s90
          %93 = vsyncadd %s88, 0
          %s94 = smul.addr %s13, 2
          %s95 = smul.addr %s94, 4
          %s96 = scalar_lea.hbm %s0, %s95
          %s98 = sshll.u32 %s96, 4
          %s99 = int_to_ptr.hbm [resolvable:$true] %s98
          %s100 = sshll.u32 %s91, 4
          %s101 = int_to_ptr.vmem [resolvable:$true] %s100
          %103 = dma.hbm_to_vmem [thread:$0]  %s99, 128, %s101, %s88
        $region20: #{tpu_custom_call.1} parent=15 // pred_fallthru
          _
      $region16: #{tpu_custom_call.1} parent=5 // pred_fallthru
        _
      %p104 = scmp.le.s32.totalorder 1, %s13
      %p105 = scmp.lt.s32.totalorder %s13, 3
      %p106 = pnand %p104, %p105
      %p107 = pneg %p106
      // Predicated region
      $region21: #{tpu_custom_call.1} parent=5 // pred_check
        _
      $region22: #{tpu_custom_call.1} parent=5 // pred_check_branch
        %109 = sbr.rel (%p106) target = $region24
      $region23: #{tpu_custom_call.1} parent=5 // pred_region
        %s110 = ssub.s32 %s13, 1
        %s111 = sand.u32 %s26, 1
        %s112 = scalar_lea.sflag [#allocation3], %s111
        %s113 = sand.u32 %s26, 1
        %s114 = smul.addr %s113, 8
        %s115 = scalar_lea.vmem [#allocation2], %s114
        // Predicated region
        $region25: #{tpu_custom_call.1} parent=23 // pred_check
          %p116 = pneg %p39
        $region26: #{tpu_custom_call.1} parent=23 // pred_check_branch
          %118 = sbr.rel (%p116) target = $region28
        $region27: #{tpu_custom_call.1} parent=23 // pred_region
          %120 = dma.done %s112, 128
        $region28: #{tpu_custom_call.1} parent=23 // pred_fallthru
          _
        %s121 = sand.u32 %s26, 1
        %s122 = scalar_lea.sflag [#allocation3], %s121
        %s123 = sand.u32 %s26, 1
        %s124 = smul.addr %s123, 8
        %s125 = scalar_lea.vmem [#allocation2], %s124
        %p126 = pneg %p39
        %p127 = pneg %p36
        %p128 = pneg %p65
        %p129 = pneg %p62
        %s130 = sand.u32 %s52, 1
        %s131 = scalar_lea.sflag [#allocation4], %s130
        %s132 = sand.u32 %s52, 1
        %s133 = smul.addr %s132, 8
        %s134 = scalar_lea.vmem [#allocation5], %s133
        %v135 = vld [vmem:[%s115] sm:$0xff]
        %137 = vst [vmem:[#allocation1] ss:$2 sm:$0xff] %v135
        %v138 = vld.sshfl [vmem:[#allocation1] sm:$0xff pattern:$0x75316420]
        %v139 = vld.sshfl [vmem:[#allocation1 + $0x8] sm:$0xff pattern:$0x75316420]
        %vm142 = vcmask 1043456
        %v143 = vsel %vm142, %v138, inf
        %v144 = vrot.slane %v143, 4
        %v145 = vmin.f32 %v143, %v144
        %v146 = vrot.slane %v145, 2
        %v147 = vmin.f32 %v145, %v146
        %v148 = vrot.slane %v147, 1
        %v149 = vmin.f32 %v147, %v148
        %v150 = vsel %vm142, %v139, inf
        %v151 = vrot.slane %v150, 4
        %v152 = vmin.f32 %v150, %v151
        %v153 = vrot.slane %v152, 2
        %v154 = vmin.f32 %v152, %v153
        %v155 = vrot.slane %v154, 1
        %v156 = vmin.f32 %v154, %v155
        %v157 = vlaneseq
        %v158 = vand.u32 %v157, 127
        %v159 = vadd.s32 %v158, 128
        %vm160 = vcmp.lt.s32.totalorder %v158, 0
        %v161 = vsub.s32 0, %v158
        %v162 = vsel %vm160, %v161, %v158
        %v163 = vshrl.u32 %v162, 4
        %v164 = vand.u32 %v162, 15
        %v165 = vsub.s32 0, %v164
        %v166 = vsel %vm160, %v165, %v164
        %vm167 = vcmp.lt.s32.totalorder %v159, 0
        %v168 = vsub.s32 0, %v159
        %v169 = vsel %vm167, %v168, %v159
        %v170 = vshrl.u32 %v169, 4
        %v171 = vand.u32 %v169, 15
        %v172 = vsub.s32 0, %v171
        %v173 = vsel %vm167, %v172, %v171
        %vm174 = vcmp.ne.s32.totalorder %v166, 0
        %vm175 = vcmp.ne.s32.totalorder %v173, 0
        %vm176 = vcmp.lt.s32.totalorder %v166, 0
        %vm177 = vcmp.lt.s32.totalorder %v173, 0
        %vm178 = vmand %vm176, %vm174
        %vm179 = vmand %vm177, %vm175
        %v180 = vadd.s32 %v166, 16
        %v181 = vadd.s32 %v173, 16
        %v182 = vsel %vm178, %v180, %v166
        %v183 = vsel %vm179, %v181, %v173
        %vm184 = vcmp.eq.s32.totalorder %v182, 15
        %vm185 = vcmp.eq.s32.totalorder %v183, 15
        %186 = vrot.lane.b32.xlu0 %v149, 127
        %v187 = vpop.permute.xlu0 %186
        %188 = vrot.lane.b32.xlu0 %v156, 127
        %v189 = vpop.permute.xlu0 %188
        %vm190 = vcmp.lt.s32.totalorder %v158, 127
        %v191 = vsel %vm190, %v187, %v189
        %v192 = vsel %vm190, %v189, %v187
        %v193 = vsel %vm184, %v149, %v191
        %v194 = vsel %vm185, %v156, %v192
        %vm195 = vcmp.eq.s32.totalorder %v182, 0
        %vm196 = vcmp.eq.s32.totalorder %v183, 0
        %197 = vrot.lane.b32.xlu0 %v149, 1
        %v198 = vpop.permute.xlu0 %197
        %199 = vrot.lane.b32.xlu0 %v156, 1
        %v200 = vpop.permute.xlu0 %199
        %vm201 = vcmp.lt.s32.totalorder %v158, 1
        %v202 = vsel %vm201, %v198, %v200
        %v203 = vsel %vm201, %v200, %v198
        %v204 = vsel %vm195, %v149, %v203
        %v205 = vsel %vm196, %v156, %v202
        %v206 = vmin.f32 %v204, %v193
        %v207 = vmin.f32 %v205, %v194
        %v208 = vmin.f32 %v149, %v206
        %v209 = vmin.f32 %v156, %v207
        %vm210 = vcmp.ge.s32.totalorder %v158, 240
        %vm211 = vcmp.ge.s32.totalorder %v159, 240
        %212 = vrot.lane.b32.xlu0 %v208, 112
        %v213 = vpop.permute.xlu0 %212
        %214 = vrot.lane.b32.xlu0 %v209, 112
        %v215 = vpop.permute.xlu0 %214
        %vm216 = vcmp.lt.s32.totalorder %v158, 112
        %v217 = vsel %vm216, %v213, %v215
        %v218 = vsel %vm216, %v215, %v213
        %v219 = vsel %vm210, %v208, %v217
        %v220 = vsel %vm211, %v209, %v218
        %vm221 = vcmp.lt.s32.totalorder %v158, 16
        %vm222 = vcmp.lt.s32.totalorder %v159, 16
        %223 = vrot.lane.b32.xlu0 %v208, 16
        %v224 = vpop.permute.xlu0 %223
        %225 = vrot.lane.b32.xlu0 %v209, 16
        %v226 = vpop.permute.xlu0 %225
        %v227 = vsel %vm221, %v224, %v226
        %v228 = vsel %vm221, %v226, %v224
        %v229 = vsel %vm221, %v208, %v228
        %v230 = vsel %vm222, %v209, %v227
        %v231 = vmin.f32 %v229, %v219
        %v232 = vmin.f32 %v230, %v220
        %v233 = vmin.f32 %v208, %v231
        %v234 = vmin.f32 %v209, %v232
        %vm235 = vcmask 1040384
        %v236 = vsel %vm235, %v233, 0.0
        %v237 = vsel %vm235, %v234, 0.0
        %v238 = vadd.f32 %v236, %v237
        %239 = vadd.xlane.f32.xlu0 %v238
        %v240 = vpop.xlane.xlu0 %239
        %v241 = vrot.slane %v240, 4
        %v242 = vadd.f32 %v240, %v241
        %v243 = vrot.slane %v242, 2
        %v244 = vadd.f32 %v242, %v243
        %v245 = vrot.slane %v244, 1
        %v246 = vadd.f32 %v244, %v245
        %s247 = vtos %v246
        %v248 = vstv %s247
        %249 = vst [vmem:[%s134] sm:$0xff] %v248
        %s250 = sand.u32 %s52, 1
        %s251 = scalar_lea.sflag [#allocation4], %s250
        %s252 = sand.u32 %s52, 1
        %s253 = smul.addr %s252, 8
        %s254 = scalar_lea.vmem [#allocation5], %s253
        // Predicated region
        $region29: #{tpu_custom_call.1} parent=23 // pred_check
          %p255 = pneg %p62
        $region30: #{tpu_custom_call.1} parent=23 // pred_check_branch
          %257 = sbr.rel (%p255) target = $region32
        $region31: #{tpu_custom_call.1} parent=23 // pred_region
          %259 = vsyncadd %s251, 0
          %s260 = smul.addr %s18, 8
          %s261 = scalar_lea.hbm %s1, %s260
          %s263 = sshll.u32 %s254, 4
          %s264 = int_to_ptr.vmem [resolvable:$true] %s263
          %s265 = sshll.u32 %s261, 4
          %s266 = int_to_ptr.hbm [resolvable:$true] %s265
          %268 = dma.vmem_to_hbm [thread:$0]  %s264, 128, %s266, %s251
        $region32: #{tpu_custom_call.1} parent=23 // pred_fallthru
          _
      $region24: #{tpu_custom_call.1} parent=5 // pred_fallthru
        _
      %p269 = scmp.le.s32.totalorder 2, %s13
      // Predicated region
      $region33: #{tpu_custom_call.1} parent=5 // pred_check
        %p270 = pneg %p269
      $region34: #{tpu_custom_call.1} parent=5 // pred_check_branch
        %272 = sbr.rel (%p270) target = $region36
      $region35: #{tpu_custom_call.1} parent=5 // pred_region
        %s273 = ssub.s32 %s13, 2
        // Predicated region
        $region37: #{tpu_custom_call.1} parent=35 // pred_check
          %p274 = pneg %p68
        $region38: #{tpu_custom_call.1} parent=35 // pred_check_branch
          %276 = sbr.rel (%p274) target = $region40
        $region39: #{tpu_custom_call.1} parent=35 // pred_region
          %s277 = sand.u32 %s53, 1
          %s278 = scalar_lea.sflag [#allocation4], %s277
          %s279 = sand.u32 %s53, 1
          %s280 = smul.addr %s279, 8
          %s281 = scalar_lea.vmem [#allocation5], %s280
          %283 = dma.done %s278, 128
        $region40: #{tpu_custom_call.1} parent=35 // pred_fallthru
          _
      $region36: #{tpu_custom_call.1} parent=5 // pred_fallthru
        _
    $region6: #{tpu_custom_call.1} parent=1 // loop_footer
      %s17 = sadd.s32 1, %s13
    $region7: #{tpu_custom_call.1} parent=1 // loop_footer_branch
      %12 = sbr.rel target = $region3
    $region8: #{tpu_custom_call.1} parent=1 // loop_exit
      _
    %284 = vsyncpa [#allocation3], 1
    %s285 = scalar_lea.sflag [#allocation3], 1
    %286 = vsyncpa %s285, 1
    %287 = vsyncpa [#allocation4], 1
    %s288 = scalar_lea.sflag [#allocation4], 1
    %289 = vsyncpa %s288, 1

</llo_original>
